<compile_context>
chip_gen: v6e
topology: v6e:2x2x1
jax: 0.10.0
libtpu: 0.0.40
codegen_flags: <defaults>
</compile_context>

<pallas_src>
import jax
import jax.numpy as jnp
from jax.experimental import pallas as pl
from jax.experimental.pallas import tpu as pltpu


def _round_up(x, m):
    return (x + m - 1) // m * m


def _make_rope_kernel(duplicate_halves):
    def kernel(pos_ref, inv_ref, cos_ref, sin_ref):
        # pos_ref: (tile_r, 1) f32 positions (broadcast axis already on sublanes)
        # inv_ref: (1, W)      f32 frequency table (constant block -> resident)
        # cos_ref / sin_ref: (tile_r, dim) in the output dtype
        freqs = pos_ref[...] * inv_ref[...]            # (tile_r, W) f32 outer product
        c = jnp.cos(freqs).astype(cos_ref.dtype)
        s = jnp.sin(freqs).astype(sin_ref.dtype)
        if duplicate_halves:
            # W == dim // 2 and is a multiple of 128: both slice stores are
            # 128-lane aligned and unmasked.
            half = inv_ref.shape[-1]
            cos_ref[:, :half] = c
            cos_ref[:, half:] = c
            sin_ref[:, :half] = s
            sin_ref[:, half:] = s
        else:
            # W == dim: single unmasked full-width store per output.
            cos_ref[...] = c
            sin_ref[...] = s
    return kernel


def _choose_tile_r(n_rows, dim, out_itemsize,
                   target_out_bytes=2 << 20, vmem_budget_bytes=12 << 20):
    """Row-tile size from a bytes-per-step target, capped by a VMEM budget."""
    bytes_out_per_row = 2 * dim * out_itemsize                   # cos + sin
    tile_r = _round_up(max(8, target_out_bytes // bytes_out_per_row), 8)
    # Double-buffered VMEM per row: 2 outputs x 2 buffers + the lane-padded
    # (row, 1) f32 positions block (512 B/row) x 2 buffers.
    vmem_per_row = 2 * 2 * dim * out_itemsize + 2 * 512
    vmem_cap = max(8, (vmem_budget_bytes // vmem_per_row) // 8 * 8)
    tile_r = min(tile_r, vmem_cap)
    # Keep >= 2 grid steps whenever possible (feeds both v7x TensorCores).
    tile_r = min(tile_r, _round_up(pl.cdiv(n_rows, 2), 8))
    return max(tile_r, 8)


def gemmoe_dyn_rotary_embedding(x, position_ids, dim, base=10000.0):
    """Returns (cos, sin), each of shape (B, S, dim) with dtype == x.dtype."""
    # TODO(synk): dynamic-NTK rescaling of `base` for seq_len > max_position_embeddings
    # is not implemented; the given PyTorch forward also always uses the fixed base.
    assert dim % 2 == 0, "rotary dim must be even"
    B, S = position_ids.shape
    R = B * S
    half = dim // 2
    out_dtype = x.dtype
    out_itemsize = jnp.dtype(out_dtype).itemsize

    # inv_freq setup (plain JAX glue, f32) — identical to the module.
    inv_freq = 1.0 / (base ** (jnp.arange(0, dim, 2, dtype=jnp.float32) / dim))

    # Half-width trig only pays off when both halves are 128-lane aligned.
    duplicate_halves = (half % 128 == 0)
    if duplicate_halves:
        freq_table = inv_freq.reshape(1, half)                    # (1, half)
        W = half
    else:
        freq_table = jnp.concatenate([inv_freq, inv_freq]).reshape(1, dim)
        W = dim

    # Flatten (B, S) -> rows; f32 positions are exact for ids < 2**24.
    pos = position_ids.reshape(R, 1).astype(jnp.float32)

    tile_r = _choose_tile_r(R, dim, out_itemsize)
    grid = (pl.cdiv(R, tile_r),)      # ragged last block handled by Pallas

    cost = pl.CostEstimate(
        flops=R * W,                                   # pos * inv multiplies
        transcendentals=2 * R * W,                     # cos + sin
        bytes_accessed=R * 4 + 2 * R * dim * out_itemsize,
    )

    cos, sin = pl.pallas_call(
        _make_rope_kernel(duplicate_halves),
        out_shape=(
            jax.ShapeDtypeStruct((R, dim), out_dtype),
            jax.ShapeDtypeStruct((R, dim), out_dtype),
        ),
        grid_spec=pl.GridSpec(
            grid=grid,
            in_specs=[
                pl.BlockSpec((tile_r, 1), lambda i: (i, 0)),      # positions
                pl.BlockSpec((1, W), lambda i: (0, 0)),           # freq table (resident)
            ],
            out_specs=(
                pl.BlockSpec((tile_r, dim), lambda i: (i, 0)),
                pl.BlockSpec((tile_r, dim), lambda i: (i, 0)),
            ),
        ),
        compiler_params=pltpu.CompilerParams(dimension_semantics=("parallel",)),
        cost_estimate=cost,
    )(pos, freq_table)

    return cos.reshape(B, S, dim), sin.reshape(B, S, dim)


def _reference(x, position_ids, dim, base=10000.0):
    inv_freq = 1.0 / (base ** (jnp.arange(0, dim, 2, dtype=jnp.float32) / dim))
    freqs = position_ids.astype(jnp.float32)[:, :, None] * inv_freq[None, None, :]
    emb = jnp.concatenate([freqs, freqs], axis=-1)
    return jnp.cos(emb).astype(x.dtype), jnp.sin(emb).astype(x.dtype)


if __name__ == "__main__":
    key = jax.random.PRNGKey(0)
    kx, kp = jax.random.split(key)

    # --- case 1: small module-like shapes, f32, dim <= 128 (full-width path) ---
    B, S, hidden, dim = 2, 8, 32, 32
    x = jax.random.normal(kx, (B, S, hidden), dtype=jnp.float32)
    position_ids = jnp.tile(jnp.arange(S, dtype=jnp.int32)[None, :], (B, 1))

    cos, sin = gemmoe_dyn_rotary_embedding(x, position_ids, dim)
    jax.block_until_ready((cos, sin))
    cos_ref, sin_ref = _reference(x, position_ids, dim)
    assert cos.shape == (B, S, dim) and sin.shape == (B, S, dim)
    assert cos.dtype == x.dtype and sin.dtype == x.dtype
    assert jnp.allclose(cos, cos_ref, atol=1e-5, rtol=1e-5)
    assert jnp.allclose(sin, sin_ref, atol=1e-5, rtol=1e-5)

    # --- case 2: row count not a multiple of the tile -> ragged last block, dim=64 f32 ---
    B2, S2, dim2 = 2, 20, 64
    x2 = jax.random.normal(kx, (B2, S2, dim2), dtype=jnp.float32)
    position_ids2 = jax.random.randint(kp, (B2, S2), 0, 512, dtype=jnp.int32)

    cos2, sin2 = gemmoe_dyn_rotary_embedding(x2, position_ids2, dim2)
    jax.block_until_ready((cos2, sin2))
    cos2_ref, sin2_ref = _reference(x2, position_ids2, dim2)
    assert cos2.shape == (B2, S2, dim2) and sin2.shape == (B2, S2, dim2)
    assert jnp.allclose(cos2, cos2_ref, atol=1e-5, rtol=1e-5)
    assert jnp.allclose(sin2, sin2_ref, atol=1e-5, rtol=1e-5)

    # --- case 3: bf16 output dtype, dim=128 full-width path, ragged rows ---
    B3, S3, dim3 = 2, 9, 128
    x3 = jax.random.normal(kx, (B3, S3, dim3), dtype=jnp.bfloat16)
    position_ids3 = jax.random.randint(kp, (B3, S3), 0, 2048, dtype=jnp.int32)

    cos3, sin3 = gemmoe_dyn_rotary_embedding(x3, position_ids3, dim3)
    jax.block_until_ready((cos3, sin3))
    cos3_ref, sin3_ref = _reference(x3, position_ids3, dim3)
    assert cos3.dtype == jnp.bfloat16 and sin3.dtype == jnp.bfloat16
    assert jnp.allclose(cos3.astype(jnp.float32), cos3_ref.astype(jnp.float32), atol=1e-2)
    assert jnp.allclose(sin3.astype(jnp.float32), sin3_ref.astype(jnp.float32), atol=1e-2)

    # --- case 4: dim=256 -> half-width trig + 128-lane-aligned duplicated stores ---
    B4, S4, dim4 = 1, 16, 256
    x4 = jax.random.normal(kx, (B4, S4, dim4), dtype=jnp.bfloat16)
    position_ids4 = jax.random.randint(kp, (B4, S4), 0, 1024, dtype=jnp.int32)

    cos4, sin4 = gemmoe_dyn_rotary_embedding(x4, position_ids4, dim4)
    jax.block_until_ready((cos4, sin4))
    cos4_ref, sin4_ref = _reference(x4, position_ids4, dim4)
    assert cos4.shape == (B4, S4, dim4)
    assert jnp.allclose(cos4.astype(jnp.float32), cos4_ref.astype(jnp.float32), atol=1e-2)
    assert jnp.allclose(sin4.astype(jnp.float32), sin4_ref.astype(jnp.float32), atol=1e-2)

    print("KERNEL_OK")
</pallas_src>

<mosaic_0001>
module attributes {stable_mosaic.version = 11 : i64} {
  func.func @kernel(%arg0: i32, %arg1: memref<8x1xf32, #tpu.memory_space<vmem>>, %arg2: memref<1x32xf32, #tpu.memory_space<vmem>>, %arg3: memref<8x32xf32, #tpu.memory_space<vmem>>, %arg4: memref<8x32xf32, #tpu.memory_space<vmem>>) attributes {dimension_semantics = [#tpu.dimension_semantics<parallel>], iteration_bounds = array<i64: 2>, scalar_prefetch = 0 : i64, scratch_operands = 0 : i64, tpu.core_type = #tpu.core_type<tc>, window_params = [{transform_indices = @transform_0, window_bounds = array<i64: 8, 1>}, {pipeline_mode = #tpu.pipeline_mode<synchronous>, transform_indices = @transform_1, window_bounds = array<i64: 1, 32>}, {transform_indices = @transform_2, window_bounds = array<i64: 8, 32>}, {transform_indices = @transform_3, window_bounds = array<i64: 8, 32>}]} {
    %c0 = arith.constant 0 : index
    %c0_0 = arith.constant 0 : index
    %0 = vector.load %arg1[%c0, %c0_0] : memref<8x1xf32, #tpu.memory_space<vmem>>, vector<8x1xf32>
    %c0_1 = arith.constant 0 : index
    %c0_2 = arith.constant 0 : index
    %1 = vector.load %arg2[%c0_1, %c0_2] : memref<1x32xf32, #tpu.memory_space<vmem>>, vector<1x32xf32>
    %2 = vector.broadcast %0 : vector<8x1xf32> to vector<8x32xf32>
    %3 = vector.broadcast %1 : vector<1x32xf32> to vector<8x32xf32>
    %4 = arith.mulf %2, %3 : vector<8x32xf32>
    %5 = math.cos %4 : vector<8x32xf32>
    %6 = math.sin %4 : vector<8x32xf32>
    %c0_3 = arith.constant 0 : index
    %c0_4 = arith.constant 0 : index
    %7 = vector.load %arg3[%c0_3, %c0_4] : memref<8x32xf32, #tpu.memory_space<vmem>>, vector<8x32xf32>
    tpu.vector_store %arg3[%c0_3, %c0_4], %5 {strides = array<i32>} : memref<8x32xf32, #tpu.memory_space<vmem>>, vector<8x32xf32>,
    %c0_5 = arith.constant 0 : index
    %c0_6 = arith.constant 0 : index
    %8 = vector.load %arg4[%c0_5, %c0_6] : memref<8x32xf32, #tpu.memory_space<vmem>>, vector<8x32xf32>
    tpu.vector_store %arg4[%c0_5, %c0_6], %6 {strides = array<i32>} : memref<8x32xf32, #tpu.memory_space<vmem>>, vector<8x32xf32>,
    return
  }
  func.func @transform_0(%arg0: i32) -> (i32, i32) {
    %c0_i32 = arith.constant 0 : i32
    %c0_i32_0 = arith.constant 0 : i32
    return %arg0, %c0_i32 : i32, i32
  }
  func.func @transform_1(%arg0: i32) -> (i32, i32) {
    %c0_i32 = arith.constant 0 : i32
    %c0_i32_0 = arith.constant 0 : i32
    %c0_i32_1 = arith.constant 0 : i32
    return %c0_i32, %c0_i32_0 : i32, i32
  }
  func.func @transform_2(%arg0: i32) -> (i32, i32) {
    %c0_i32 = arith.constant 0 : i32
    %c0_i32_0 = arith.constant 0 : i32
    return %arg0, %c0_i32 : i32, i32
  }
  func.func @transform_3(%arg0: i32) -> (i32, i32) {
    %c0_i32 = arith.constant 0 : i32
    %c0_i32_0 = arith.constant 0 : i32
    return %arg0, %c0_i32 : i32, i32
  }
}

</mosaic_0001>

<llo_original>
// kernel: tpu_custom_call.1
$region0: #{tpu_custom_call.1}
  #allocation0 [shape = 'u32[]', space=smem, size = 0x4, offset = 0x4, fixed_abs, tag = 'smem constant byte address 0x4 - core index']
  #allocation1 [shape = 'u32[144,128]{1,0:T(1,128)}', space=vmem, size = 0x12000, scoped, tag = 'internal scratch']
  %s0 = inlined_call_operand.vmem [shape: f32[16,1], index: 0, kind: input, shape index: {}]
  %s1 = inlined_call_operand.vmem [shape: f32[1,32], index: 1, kind: input, shape index: {}]
  %s2 = inlined_call_operand.hbm [shape: f32[16,32], index: 2, kind: output, shape index: {0}]
  %s3 = inlined_call_operand.hbm [shape: f32[16,32], index: 3, kind: output, shape index: {1}]
  %4 = xla_tuple %s2, %s3
  %s5 = sld [smem:[#allocation0]]
  $region49: #{tpu_custom_call.1} parent=0
    _
  %s7 = ssub.s32 1, %s5
  %s8 = scalar_select 0, %s7, %s5
  $region1: #{tpu_custom_call.1} parent=0
    #allocation2 [shape = 'u8[8192]{0}', space=vmem, size = 0x2000, scoped, tag = 'output window, operand 0']
    #allocation3 [shape = 's32[2]{0}', space=sflag, size = 0x8, scoped, tag = 'scoped memory for tpu_custom_call.1']
    #allocation4 [shape = 'u8[8192]{0}', space=vmem, size = 0x2000, scoped, tag = 'output window, operand 1']
    #allocation5 [shape = 's32[2]{0}', space=sflag, size = 0x8, scoped, tag = 'scoped memory for tpu_custom_call.1']
    %9 = vsyncpa [#allocation3], 0
    %s10 = scalar_lea.sflag [#allocation3], 1
    %11 = vsyncpa %s10, 0
    %12 = vsyncpa [#allocation5], 0
    %s13 = scalar_lea.sflag [#allocation5], 1
    %14 = vsyncpa %s13, 0
    loop: start=0, step=1, limit=4
    $region2: #{tpu_custom_call.1} parent=1 // loop_pre_header
      _
    $region3: #{tpu_custom_call.1} parent=1 // loop_header
      %s16 = sphi 0, %s20
      %p17 = scmp.ge.s32.totalorder %s16, 4
      %s26 = sphi 0, %s28
      %s29 = sphi 0, %s26
      %s30 = sphi 0, %s29
      %s46 = sphi 0, %s30
      %s50 = sphi 0, %s50
      %s52 = sphi 0, %s50
      %s53 = sphi 0, %s52
      %s67 = sphi 0, %s53
      %s73 = sphi 0, %s75
      %s76 = sphi 0, %s73
      %s77 = sphi 0, %s76
      %s93 = sphi 0, %s77
      %s99 = sphi 0, %s101
      %s102 = sphi 0, %s99
      %s103 = sphi 0, %s102
      %s119 = sphi 0, %s103
    $region4: #{tpu_custom_call.1} parent=1 // loop_header_branch
      %19 = sbr.rel (%p17) target = $region8
    $region5: #{tpu_custom_call.1} parent=1 // loop_body
      %s21 = ssub.s32 %s16, 1
      %s22 = ssub.s32 %s16, 2
      %s23 = sadd.s32 %s16, 1
      %s24 = ssub.s32 %s16, %s23
      %p25 = scmp.eq.s32.totalorder %s24, 0
      %s27 = sadd.s32 %s26, 1
      %s28 = scalar_select %p25, %s26, %s27
      %p31 = pneg %p25
      %p32 = scmp.eq.s32.totalorder %s16, 1
      %p33 = por %p31, %p32
      %p34 = scmp.ne.s32.totalorder %s26, %s29
      %p35 = scmp.eq.s32.totalorder %s16, 0
      %p36 = por %p34, %p35
      %p37 = scmp.ne.s32.totalorder %s26, %s29
      %p38 = scmp.eq.s32.totalorder %s21, 1
      %p39 = por %p37, %p38
      %p40 = scmp.ne.s32.totalorder %s29, %s30
      %p41 = scmp.eq.s32.totalorder %s21, 0
      %p42 = por %p40, %p41
      %p43 = scmp.ne.s32.totalorder %s29, %s30
      %p44 = scmp.eq.s32.totalorder %s22, 1
      %p45 = por %p43, %p44
      %p47 = scmp.ne.s32.totalorder %s30, %s46
      %p48 = scmp.eq.s32.totalorder %s22, 0
      %p49 = por %p47, %p48
      %s51 = sadd.s32 %s50, 1
      %p54 = scmp.eq.s32.totalorder %s16, 1
      %p55 = scmp.ne.s32.totalorder %s50, %s52
      %p56 = scmp.eq.s32.totalorder %s16, 0
      %p57 = por %p55, %p56
      %p58 = scmp.ne.s32.totalorder %s50, %s52
      %p59 = scmp.eq.s32.totalorder %s21, 1
      %p60 = por %p58, %p59
      %p61 = scmp.ne.s32.totalorder %s52, %s53
      %p62 = scmp.eq.s32.totalorder %s21, 0
      %p63 = por %p61, %p62
      %p64 = scmp.ne.s32.totalorder %s52, %s53
      %p65 = scmp.eq.s32.totalorder %s22, 1
      %p66 = por %p64, %p65
      %p68 = scmp.ne.s32.totalorder %s53, %s67
      %p69 = scmp.eq.s32.totalorder %s22, 0
      %p70 = por %p68, %p69
      %s71 = ssub.s32 %s16, %s23
      %p72 = scmp.eq.s32.totalorder %s71, 0
      %s74 = sadd.s32 %s73, 1
      %s75 = scalar_select %p72, %s73, %s74
      %p78 = pneg %p72
      %p79 = scmp.eq.s32.totalorder %s16, 1
      %p80 = por %p78, %p79
      %p81 = scmp.ne.s32.totalorder %s73, %s76
      %p82 = scmp.eq.s32.totalorder %s16, 0
      %p83 = por %p81, %p82
      %p84 = scmp.ne.s32.totalorder %s73, %s76
      %p85 = scmp.eq.s32.totalorder %s21, 1
      %p86 = por %p84, %p85
      %p87 = scmp.ne.s32.totalorder %s76, %s77
      %p88 = scmp.eq.s32.totalorder %s21, 0
      %p89 = por %p87, %p88
      %p90 = scmp.ne.s32.totalorder %s76, %s77
      %p91 = scmp.eq.s32.totalorder %s22, 1
      %p92 = por %p90, %p91
      %p94 = scmp.ne.s32.totalorder %s77, %s93
      %p95 = scmp.eq.s32.totalorder %s22, 0
      %p96 = por %p94, %p95
      %s97 = ssub.s32 %s16, %s23
      %p98 = scmp.eq.s32.totalorder %s97, 0
      %s100 = sadd.s32 %s99, 1
      %s101 = scalar_select %p98, %s99, %s100
      %p104 = pneg %p98
      %p105 = scmp.eq.s32.totalorder %s16, 1
      %p106 = por %p104, %p105
      %p107 = scmp.ne.s32.totalorder %s99, %s102
      %p108 = scmp.eq.s32.totalorder %s16, 0
      %p109 = por %p107, %p108
      %p110 = scmp.ne.s32.totalorder %s99, %s102
      %p111 = scmp.eq.s32.totalorder %s21, 1
      %p112 = por %p110, %p111
      %p113 = scmp.ne.s32.totalorder %s102, %s103
      %p114 = scmp.eq.s32.totalorder %s21, 0
      %p115 = por %p113, %p114
      %p116 = scmp.ne.s32.totalorder %s102, %s103
      %p117 = scmp.eq.s32.totalorder %s22, 1
      %p118 = por %p116, %p117
      %p120 = scmp.ne.s32.totalorder %s103, %s119
      %p121 = scmp.eq.s32.totalorder %s22, 0
      %p122 = por %p120, %p121
      %p123 = scmp.le.s32.totalorder 1, %s16
      %p124 = scmp.lt.s32.totalorder %s16, 3
      %p125 = pnand %p123, %p124
      %p126 = pneg %p125
      // Predicated region
      $region9: #{tpu_custom_call.1} parent=5 // pred_check
        _
      $region10: #{tpu_custom_call.1} parent=5 // pred_check_branch
        %128 = sbr.rel (%p125) target = $region12
      $region11: #{tpu_custom_call.1} parent=5 // pred_region
        %s129 = ssub.s32 %s16, 1
        // Predicated region
        $region13: #{tpu_custom_call.1} parent=11 // pred_check
          %p130 = pneg %p63
        $region14: #{tpu_custom_call.1} parent=11 // pred_check_branch
          %132 = sbr.rel (%p130) target = $region16
        $region15: #{tpu_custom_call.1} parent=11 // pred_region
          _
        $region16: #{tpu_custom_call.1} parent=11 // pred_fallthru
          _
      $region12: #{tpu_custom_call.1} parent=5 // pred_fallthru
        _
      %p133 = scmp.lt.s32.totalorder %s16, 2
      // Predicated region
      $region17: #{tpu_custom_call.1} parent=5 // pred_check
        %p134 = pneg %p133
      $region18: #{tpu_custom_call.1} parent=5 // pred_check_branch
        %136 = sbr.rel (%p134) target = $region20
      $region19: #{tpu_custom_call.1} parent=5 // pred_region
        // Predicated region
        $region21: #{tpu_custom_call.1} parent=19 // pred_check
          %p137 = pneg %p36
        $region22: #{tpu_custom_call.1} parent=19 // pred_check_branch
          %139 = sbr.rel (%p137) target = $region24
        $region23: #{tpu_custom_call.1} parent=19 // pred_region
          %p140 = scmp.lt.s32.totalorder %s16, 1
          %s141 = scalar_select %p140, %s16, 1
          %s142 = smul.addr %s141, 8
          %s143 = scalar_lea.vmem %s0, %s142
        $region24: #{tpu_custom_call.1} parent=19 // pred_fallthru
          _
      $region20: #{tpu_custom_call.1} parent=5 // pred_fallthru
        _
      %p144 = scmp.le.s32.totalorder 1, %s16
      %p145 = scmp.lt.s32.totalorder %s16, 3
      %p146 = pnand %p144, %p145
      %p147 = pneg %p146
      // Predicated region
      $region25: #{tpu_custom_call.1} parent=5 // pred_check
        _
      $region26: #{tpu_custom_call.1} parent=5 // pred_check_branch
        %149 = sbr.rel (%p146) target = $region28
      $region27: #{tpu_custom_call.1} parent=5 // pred_region
        %s150 = ssub.s32 %s16, 1
        %p151 = scmp.lt.s32.totalorder %s21, 1
        %s152 = scalar_select %p151, %s21, 1
        %s153 = smul.addr %s152, 8
        %s154 = scalar_lea.vmem %s0, %s153
        %p155 = pneg %p42
        %p156 = pneg %p39
        %p157 = pneg %p63
        %p158 = pneg %p60
        %p159 = pneg %p89
        %p160 = pneg %p86
        %s161 = sand.u32 %s76, 1
        %s162 = scalar_lea.sflag [#allocation3], %s161
        %s163 = sand.u32 %s76, 1
        %s164 = smul.addr %s163, 8
        %s165 = scalar_lea.vmem [#allocation2], %s164
        %p166 = pneg %p115
        %p167 = pneg %p112
        %s168 = sand.u32 %s102, 1
        %s169 = scalar_lea.sflag [#allocation5], %s168
        %s170 = sand.u32 %s102, 1
        %s171 = smul.addr %s170, 8
        %s172 = scalar_lea.vmem [#allocation4], %s171
        %p173 = scmp.lt.s32.totalorder %s21, 1
        %s174 = scalar_select %p173, %s21, 1
        %s175 = smul.addr %s174, 8
        %s176 = scalar_lea.vmem %s0, %s175
        %v177 = vld [vmem:[%s176] sm:$0xff]
        %v178 = vld [vmem:[%s1] sm:$0x1]
        %180 = vset.pattern.permute.xlu0 0
        %181 = vperm.xlu0 %180, %v177
        %v182 = vpop.permute.xlu0 %181
        %v185 = vlaneseq
        %v186 = vshrl.u32 %v185, 7
        %v187 = vsub.s32 0, %v186
        %v188 = vrot.slane %v178, %v187
        %v190 = vmul.f32 %v182, %v188
        %v191 = vand.u32 2147483647, %v190
        %vm192 = vcmp.le.f32.partialorder %v191, 0.7853982
        %vm193 = vcmp.lt.s32.totalorder %v190, 0
        %v194 = vand.u32 %v190, 2139095040
        %v195 = vshrl.u32 %v194, 23
        %v196 = vsub.s32 %v195, 127
        %v197 = vand.u32 2147483647, %v190
        %v198 = vand.u32 %v197, 8388607
        %v199 = vor.u32 %v198, 8388608
        %v200 = vsub.s32 0, %v199
        %v201 = vadd.s32 %v196, 1
        %vm202 = vcmp.gt.s32.totalorder %v201, 0
        %v203 = vsel %vm202, %v201, 0
        %v204 = vshrl.u32 %v203, 5
        %v205 = vand.u32 %v203, 31
        %v206 = vsub.s32 32, %v205
        %v207 = vshrl.u32 683565275, %v206
        %v208 = vshll.u32 683565275, %v205
        %v209 = vshrl.u32 2475754826, %v206
        %v210 = vor.u32 %v208, %v209
        %v211 = vshll.u32 2475754826, %v205
        %v212 = vshrl.u32 2131351028, %v206
        %v213 = vor.u32 %v211, %v212
        %v214 = vshll.u32 2131351028, %v205
        %v215 = vshrl.u32 2102212464, %v206
        %v216 = vor.u32 %v214, %v215
        %v217 = vshll.u32 2102212464, %v205
        %v218 = vshrl.u32 920167782, %v206
        %v219 = vor.u32 %v217, %v218
        %v220 = vshll.u32 920167782, %v205
        %v221 = vshrl.u32 1326507024, %v206
        %v222 = vor.u32 %v220, %v221
        %vm223 = vcmp.lt.s32.totalorder %v204, 1
        %vm224 = vcmp.lt.s32.totalorder %v204, 2
        %vm225 = vcmp.lt.s32.totalorder %v204, 3
        %vm226 = vcmp.lt.s32.totalorder %v204, 4
        %v227 = vsel %vm223, %v207, %v210
        %v228 = vsel %vm226, %v216, 2102212464
        %v229 = vsel %vm225, %v213, %v228
        %v230 = vsel %vm224, %v227, %v229
        %v231 = vsel %vm223, %v210, %v213
        %v232 = vsel %vm226, %v219, 920167782
        %v233 = vsel %vm225, %v216, %v232
        %v234 = vsel %vm224, %v231, %v233
        %v235 = vsel %vm223, %v213, %v216
        %v236 = vsel %vm226, %v222, 1326507024
        %v237 = vsel %vm225, %v219, %v236
        %v238 = vsel %vm224, %v235, %v237
        %v239 = vshll.u32 %v199, 8
        %v240 = vmul.u32.u64.compose %v239, %v238
        %v241 = vextract.low.u32 %v240
        %v242 = vextract.high.u32 %v240
        %v243 = vmul.u32.u64.compose %v239, %v234
        %v244 = vextract.low.u32 %v243
        %v245 = vextract.high.u32 %v243
        %v246 = vmul.u32 %v239, %v230
        %v247 = vadd.s32 %v242, %v244
        %vm248 = vc.u32 %v242, %v244
        %v249 = vadd.s32 %v245, 1
        %v250 = vsel %vm248, %v249, %v245
        %v251 = vadd.s32 %v246, %v250
        %v252 = vadd.s32 %v251, 536870912
        %v253 = vshrl.u32 %v252, 30
        %v254 = vshll.u32 %v253, 30
        %v255 = vsub.s32 %v251, %v254
        %vm256 = vcmp.lt.s32.totalorder %v255, 0
        %v257 = vsub.s32 0, %v255
        %v258 = vsel %vm256, %v257, %v255
        %v259 = vclz %v258
        %v260 = vsub.s32 %v259, 2
        %vm261 = vcmp.gt.s32.totalorder 0, %v260
        %v262 = vsel %vm261, 0, %v260
        %v263 = vsub.s32 32, %v262
        %v264 = vshll.u32 %v255, %v262
        %v265 = vshrl.u32 %v247, %v263
        %v266 = vor.u32 %v264, %v265
        %v267 = vsub.s32 4294967266, %v262
        %v268 = vadd.s32 %v267, 127
        %v269 = vshll.u32 %v268, 23
        %v270 = vor.u32 4788187, %v269
        %v271 = vand.u32 2147483647, %v270
        %v273 = vcvt.s32.f32 %v266
        %v274 = vmul.f32 %v273, %v271
        %v275 = vxor.u32 %v274, 2147483648
        %v276 = vsel %vm193, %v275, %v274
        %v277 = vsub.s32 4, %v253
        %v278 = vsel %vm193, %v277, %v253
        %v279 = vsel %vm192, %v190, %v276
        %v280 = vsel %vm192, 0, %v278
        %v281 = vcosq.f32.pop %v279
        %v282 = vsinq.f32.pop %v279
        %vm283 = vweird.f32 %v190
        %v284 = vand.u32 %v280, 3
        %vm285 = vcmp.lt.s32.totalorder %v284, 2
        %vm286 = vcmp.eq.s32.totalorder %v284, 0
        %v287 = vxor.u32 %v282, 2147483648
        %v288 = vsel %vm286, %v281, %v287
        %vm289 = vcmp.eq.s32.totalorder %v284, 2
        %v290 = vxor.u32 %v281, 2147483648
        %v291 = vsel %vm289, %v290, %v282
        %v292 = vsel %vm285, %v288, %v291
        %v293 = vsel %vm283, nan, %v292
        %v294 = vand.u32 2147483647, %v190
        %vm295 = vcmp.le.f32.partialorder %v294, 0.7853982
        %vm296 = vcmp.lt.s32.totalorder %v190, 0
        %v297 = vand.u32 %v190, 2139095040
        %v298 = vshrl.u32 %v297, 23
        %v299 = vsub.s32 %v298, 127
        %v300 = vand.u32 2147483647, %v190
        %v301 = vand.u32 %v300, 8388607
        %v302 = vor.u32 %v301, 8388608
        %v303 = vsub.s32 0, %v302
        %v304 = vadd.s32 %v299, 1
        %vm305 = vcmp.gt.s32.totalorder %v304, 0
        %v306 = vsel %vm305, %v304, 0
        %v307 = vshrl.u32 %v306, 5
        %v308 = vand.u32 %v306, 31
        %v309 = vsub.s32 32, %v308
        %v310 = vshrl.u32 683565275, %v309
        %v311 = vshll.u32 683565275, %v308
        %v312 = vshrl.u32 2475754826, %v309
        %v313 = vor.u32 %v311, %v312
        %v314 = vshll.u32 2475754826, %v308
        %v315 = vshrl.u32 2131351028, %v309
        %v316 = vor.u32 %v314, %v315
        %v317 = vshll.u32 2131351028, %v308
        %v318 = vshrl.u32 2102212464, %v309
        %v319 = vor.u32 %v317, %v318
        %v320 = vshll.u32 2102212464, %v308
        %v321 = vshrl.u32 920167782, %v309
        %v322 = vor.u32 %v320, %v321
        %v323 = vshll.u32 920167782, %v308
        %v324 = vshrl.u32 1326507024, %v309
        %v325 = vor.u32 %v323, %v324
        %vm326 = vcmp.lt.s32.totalorder %v307, 1
        %vm327 = vcmp.lt.s32.totalorder %v307, 2
        %vm328 = vcmp.lt.s32.totalorder %v307, 3
        %vm329 = vcmp.lt.s32.totalorder %v307, 4
        %v330 = vsel %vm326, %v310, %v313
        %v331 = vsel %vm329, %v319, 2102212464
        %v332 = vsel %vm328, %v316, %v331
        %v333 = vsel %vm327, %v330, %v332
        %v334 = vsel %vm326, %v313, %v316
        %v335 = vsel %vm329, %v322, 920167782
        %v336 = vsel %vm328, %v319, %v335
        %v337 = vsel %vm327, %v334, %v336
        %v338 = vsel %vm326, %v316, %v319
        %v339 = vsel %vm329, %v325, 1326507024
        %v340 = vsel %vm328, %v322, %v339
        %v341 = vsel %vm327, %v338, %v340
        %v342 = vshll.u32 %v302, 8
        %v343 = vmul.u32.u64.compose %v342, %v341
        %v344 = vextract.low.u32 %v343
        %v345 = vextract.high.u32 %v343
        %v346 = vmul.u32.u64.compose %v342, %v337
        %v347 = vextract.low.u32 %v346
        %v348 = vextract.high.u32 %v346
        %v349 = vmul.u32 %v342, %v333
        %v350 = vadd.s32 %v345, %v347
        %vm351 = vc.u32 %v345, %v347
        %v352 = vadd.s32 %v348, 1
        %v353 = vsel %vm351, %v352, %v348
        %v354 = vadd.s32 %v349, %v353
        %v355 = vadd.s32 %v354, 536870912
        %v356 = vshrl.u32 %v355, 30
        %v357 = vshll.u32 %v356, 30
        %v358 = vsub.s32 %v354, %v357
        %vm359 = vcmp.lt.s32.totalorder %v358, 0
        %v360 = vsub.s32 0, %v358
        %v361 = vsel %vm359, %v360, %v358
        %v362 = vclz %v361
        %v363 = vsub.s32 %v362, 2
        %vm364 = vcmp.gt.s32.totalorder 0, %v363
        %v365 = vsel %vm364, 0, %v363
        %v366 = vsub.s32 32, %v365
        %v367 = vshll.u32 %v358, %v365
        %v368 = vshrl.u32 %v350, %v366
        %v369 = vor.u32 %v367, %v368
        %v370 = vsub.s32 4294967266, %v365
        %v371 = vadd.s32 %v370, 127
        %v372 = vshll.u32 %v371, 23
        %v373 = vor.u32 4788187, %v372
        %v374 = vand.u32 2147483647, %v373
        %v376 = vcvt.s32.f32 %v369
        %v377 = vmul.f32 %v376, %v374
        %v378 = vxor.u32 %v377, 2147483648
        %v379 = vsel %vm296, %v378, %v377
        %v380 = vsub.s32 4, %v356
        %v381 = vsel %vm296, %v380, %v356
        %v382 = vsel %vm295, %v190, %v379
        %v383 = vsel %vm295, 0, %v381
        %v384 = vcosq.f32.pop %v382
        %v385 = vsinq.f32.pop %v382
        %vm386 = vweird.f32 %v190
        %v387 = vadd.s32 %v383, 3
        %v388 = vand.u32 %v387, 3
        %vm389 = vcmp.lt.s32.totalorder %v388, 2
        %vm390 = vcmp.eq.s32.totalorder %v388, 0
        %v391 = vxor.u32 %v385, 2147483648
        %v392 = vsel %vm390, %v384, %v391
        %vm393 = vcmp.eq.s32.totalorder %v388, 2
        %v394 = vxor.u32 %v384, 2147483648
        %v395 = vsel %vm393, %v394, %v385
        %v396 = vsel %vm389, %v392, %v395
        %v397 = vsel %vm386, nan, %v396
        %vm398 = vcmask 261120
        %399 = vst.msk [vmem:[%s165] sm:$0xff] %vm398, %v293
        %400 = vst.msk [vmem:[%s172] sm:$0xff] %vm398, %v397
        %s401 = sand.u32 %s76, 1
        %s402 = scalar_lea.sflag [#allocation3], %s401
        %s403 = sand.u32 %s76, 1
        %s404 = smul.addr %s403, 8
        %s405 = scalar_lea.vmem [#allocation2], %s404
        %s406 = sand.u32 %s102, 1
        %s407 = scalar_lea.sflag [#allocation5], %s406
        %s408 = sand.u32 %s102, 1
        %s409 = smul.addr %s408, 8
        %s410 = scalar_lea.vmem [#allocation4], %s409
        // Predicated region
        $region29: #{tpu_custom_call.1} parent=27 // pred_check
          %p411 = pneg %p86
        $region30: #{tpu_custom_call.1} parent=27 // pred_check_branch
          %413 = sbr.rel (%p411) target = $region32
        $region31: #{tpu_custom_call.1} parent=27 // pred_region
          %s415 = ssub.s32 128, 128
          %416 = vsyncadd %s402, %s415
          %s417 = smul.addr %s21, 128
          %s418 = scalar_lea.hbm %s2, %s417
          %s420 = sshll.u32 %s405, 4
          %s421 = int_to_ptr.vmem [resolvable:$true] %s420
          %423 = dma.vmem_to_hbm [thread:$0]  %s421, 128, %s418, %s402
        $region32: #{tpu_custom_call.1} parent=27 // pred_fallthru
          _
        // Predicated region
        $region33: #{tpu_custom_call.1} parent=27 // pred_check
          %p424 = pneg %p112
        $region34: #{tpu_custom_call.1} parent=27 // pred_check_branch
          %426 = sbr.rel (%p424) target = $region36
        $region35: #{tpu_custom_call.1} parent=27 // pred_region
          %s428 = ssub.s32 128, 128
          %429 = vsyncadd %s407, %s428
          %s430 = smul.addr %s21, 128
          %s431 = scalar_lea.hbm %s3, %s430
          %s433 = sshll.u32 %s410, 4
          %s434 = int_to_ptr.vmem [resolvable:$true] %s433
          %436 = dma.vmem_to_hbm [thread:$0]  %s434, 128, %s431, %s407
        $region36: #{tpu_custom_call.1} parent=27 // pred_fallthru
          _
      $region28: #{tpu_custom_call.1} parent=5 // pred_fallthru
        _
      %p437 = scmp.le.s32.totalorder 2, %s16
      // Predicated region
      $region37: #{tpu_custom_call.1} parent=5 // pred_check
        %p438 = pneg %p437
      $region38: #{tpu_custom_call.1} parent=5 // pred_check_branch
        %440 = sbr.rel (%p438) target = $region40
      $region39: #{tpu_custom_call.1} parent=5 // pred_region
        %s441 = ssub.s32 %s16, 2
        // Predicated region
        $region41: #{tpu_custom_call.1} parent=39 // pred_check
          %p442 = pneg %p92
        $region42: #{tpu_custom_call.1} parent=39 // pred_check_branch
          %444 = sbr.rel (%p442) target = $region44
        $region43: #{tpu_custom_call.1} parent=39 // pred_region
          %s445 = sand.u32 %s77, 1
          %s446 = scalar_lea.sflag [#allocation3], %s445
          %s447 = sand.u32 %s77, 1
          %s448 = smul.addr %s447, 8
          %s449 = scalar_lea.vmem [#allocation2], %s448
          %450 = dma.done %s446, 128
        $region44: #{tpu_custom_call.1} parent=39 // pred_fallthru
          _
        // Predicated region
        $region45: #{tpu_custom_call.1} parent=39 // pred_check
          %p451 = pneg %p118
        $region46: #{tpu_custom_call.1} parent=39 // pred_check_branch
          %453 = sbr.rel (%p451) target = $region48
        $region47: #{tpu_custom_call.1} parent=39 // pred_region
          %s454 = sand.u32 %s103, 1
          %s455 = scalar_lea.sflag [#allocation5], %s454
          %s456 = sand.u32 %s103, 1
          %s457 = smul.addr %s456, 8
          %s458 = scalar_lea.vmem [#allocation4], %s457
          %459 = dma.done %s455, 128
        $region48: #{tpu_custom_call.1} parent=39 // pred_fallthru
          _
      $region40: #{tpu_custom_call.1} parent=5 // pred_fallthru
        _
    $region6: #{tpu_custom_call.1} parent=1 // loop_footer
      %s20 = sadd.s32 1, %s16
    $region7: #{tpu_custom_call.1} parent=1 // loop_footer_branch
      %15 = sbr.rel target = $region3
    $region8: #{tpu_custom_call.1} parent=1 // loop_exit
      _
    %460 = vsyncpa [#allocation3], 1
    %s461 = scalar_lea.sflag [#allocation3], 1
    %462 = vsyncpa %s461, 1
    %463 = vsyncpa [#allocation5], 1
    %s464 = scalar_lea.sflag [#allocation5], 1
    %465 = vsyncpa %s464, 1

</llo_original>
